<compile_context>
chip_gen: v7x
topology: tpu7x:2x2x1
jax: 0.10.0
libtpu: 0.0.40
codegen_flags: <defaults>
</compile_context>

<pallas_src>
import functools

import jax
import jax.numpy as jnp
from jax.experimental import pallas as pl
from jax.experimental.pallas import tpu as pltpu


def _mlp_kernel(x_ref, w1_ref, b1_ref, w2_ref, b2_ref, w3_ref, b3_ref,
                swap_ref, out_ref, *, eval_mode: bool):
    """Whole forward pass for one batch tile, fused in VMEM."""
    x = x_ref[...]                                            # [tb, F] (f32 or bf16)

    # fc1 + ReLU: matmul in the input/weight dtype, accumulate + elementwise f32.
    h1 = jnp.dot(x, w1_ref[...], preferred_element_type=jnp.float32)
    h1 = jnp.maximum(h1 + b1_ref[...].astype(jnp.float32), 0.0)

    # fc2 + ReLU: cast the activation to the weight dtype so bf16 weights keep
    # the bf16 MXU path (no-op when everything is f32).
    h2 = jnp.dot(h1.astype(w2_ref.dtype), w2_ref[...],
                 preferred_element_type=jnp.float32)
    h2 = jnp.maximum(h2 + b2_ref[...].astype(jnp.float32), 0.0)

    # ps_out
    z = jnp.dot(h2.astype(w3_ref.dtype), w3_ref[...],
                preferred_element_type=jnp.float32)
    z = z + b3_ref[...].astype(jnp.float32)                   # [tb, C] f32

    if eval_mode:
        if z.shape[-1] == 2:
            # 2-class softmax without cross-lane reductions:
            #   softmax(z)_c = 1 / (1 + exp(z_{1-c} - z_c))
            # z_{1-c} via a tiny matmul against the constant swap matrix
            # [[0,1],[1,0]] (keeps the XLU idle; exp/reciprocal on the EUP).
            z_other = jnp.dot(z, swap_ref[...],
                              preferred_element_type=jnp.float32)
            e = jnp.exp(z_other - z)
            p = pl.reciprocal(1.0 + e, approx=False)
            out_ref[...] = p.astype(out_ref.dtype)
        else:
            # General fallback: numerically stable softmax over the class dim.
            m = jnp.max(z, axis=-1, keepdims=True)
            e = jnp.exp(z - m)
            denom = jnp.sum(e, axis=-1, keepdims=True)
            out_ref[...] = (e * pl.reciprocal(denom, approx=False)).astype(out_ref.dtype)
    else:
        out_ref[...] = z.astype(out_ref.dtype)


def _round_up(n, m):
    return ((n + m - 1) // m) * m


def propensity_net_forward(x, params, *, phase=None, tile_b=512):
    """Runs the Propensity_net_NN forward pass via a Pallas TPU kernel.

    x:       [B, input_nodes], float32 or bfloat16
    params:  dict with w1 [F,25], b1 [1,25], w2 [25,25], b2 [1,25],
             w3 [25,2], b3 [1,2]; weights may be bf16 for the MXU fast path.
    phase:   'eval' -> softmax over classes, else raw logits (always f32 out).
    tile_b:  batch tile; sweep 512-2048 for large B.  Keep >= 2 grid steps on
             v7x so the "parallel" batch axis can shard across its 2 TensorCores.
    """
    w1, b1 = params["w1"], params["b1"]
    w2, b2 = params["w2"], params["b2"]
    w3, b3 = params["w3"], params["b3"]

    B, F = x.shape
    H = w1.shape[1]          # 25
    C = w3.shape[1]          # 2

    # Batch tile: multiple of 8 (sublane), capped so tiny batches use one block.
    # No wrapper-side padding: Pallas handles the ragged last block.
    tile = min(_round_up(tile_b, 8), _round_up(B, 8))
    grid = (pl.cdiv(B, tile),)

    # Constant 2x2 column-swap matrix for the reduction-free 2-class softmax.
    swap = jnp.array([[0.0, 1.0], [1.0, 0.0]], dtype=jnp.float32)

    kernel = functools.partial(_mlp_kernel, eval_mode=(phase == "eval"))

    out = pl.pallas_call(
        kernel,
        out_shape=jax.ShapeDtypeStruct((B, C), jnp.float32),
        grid_spec=pltpu.PrefetchScalarGridSpec(
            num_scalar_prefetch=0,
            grid=grid,
            in_specs=[
                pl.BlockSpec((tile, F), lambda i: (i, 0)),   # x tile (ragged tail masked)
                pl.BlockSpec((F, H),    lambda i: (0, 0)),   # w1 (constant index -> DMA'd once)
                pl.BlockSpec((1, H),    lambda i: (0, 0)),   # b1
                pl.BlockSpec((H, H),    lambda i: (0, 0)),   # w2
                pl.BlockSpec((1, H),    lambda i: (0, 0)),   # b2
                pl.BlockSpec((H, C),    lambda i: (0, 0)),   # w3
                pl.BlockSpec((1, C),    lambda i: (0, 0)),   # b3
                pl.BlockSpec((C, C),    lambda i: (0, 0)),   # swap (eval softmax)
            ],
            out_specs=pl.BlockSpec((tile, C), lambda i: (i, 0)),
        ),
        compiler_params=pltpu.CompilerParams(
            dimension_semantics=("parallel",)),
    )(x, w1, b1, w2, b2, w3, b3, swap)

    return out


def init_params(key, input_nodes, hidden=25, n_classes=2):
    """Deterministic PyTorch-style init: U(-1/sqrt(fan_in), 1/sqrt(fan_in))."""
    k1, k2, k3, k4, k5, k6 = jax.random.split(key, 6)

    def u(k, shape, fan_in):
        bound = 1.0 / jnp.sqrt(jnp.float32(fan_in))
        return jax.random.uniform(k, shape, jnp.float32, -bound, bound)

    return {
        "w1": u(k1, (input_nodes, hidden), input_nodes),
        "b1": u(k2, (1, hidden), input_nodes),
        "w2": u(k3, (hidden, hidden), hidden),
        "b2": u(k4, (1, hidden), hidden),
        "w3": u(k5, (hidden, n_classes), hidden),
        "b3": u(k6, (1, n_classes), hidden),
    }


def _reference_forward(x, params, phase=None):
    x = x.astype(jnp.float32)
    h1 = jnp.maximum(x @ params["w1"].astype(jnp.float32) + params["b1"], 0.0)
    h2 = jnp.maximum(h1 @ params["w2"].astype(jnp.float32) + params["b2"], 0.0)
    logits = h2 @ params["w3"].astype(jnp.float32) + params["b3"]
    if phase == "eval":
        return jax.nn.softmax(logits, axis=1)
    return logits


if __name__ == "__main__":
    key = jax.random.PRNGKey(0)
    k_x, k_p, k_x2 = jax.random.split(key, 3)

    input_nodes = 25   # IHDP covariate count
    batch = 16

    x = jax.random.normal(k_x, (batch, input_nodes), jnp.float32)
    params = init_params(k_p, input_nodes)

    # ---- f32 path: train (raw logits) and eval (softmax probabilities) ----
    logits = jax.block_until_ready(propensity_net_forward(x, params, phase="train"))
    probs = jax.block_until_ready(propensity_net_forward(x, params, phase="eval"))

    ref_logits = _reference_forward(x, params, phase="train")
    ref_probs = _reference_forward(x, params, phase="eval")
    assert jnp.allclose(logits, ref_logits, atol=1e-5, rtol=1e-5)
    assert jnp.allclose(probs, ref_probs, atol=1e-5, rtol=1e-5)
    assert jnp.allclose(jnp.sum(probs, axis=1), 1.0, atol=1e-5)

    # ---- ragged, multi-step grid (no wrapper padding): B not tile-aligned ----
    x2 = jax.random.normal(k_x2, (300, input_nodes), jnp.float32)
    probs2 = jax.block_until_ready(
        propensity_net_forward(x2, params, phase="eval", tile_b=128))
    assert probs2.shape == (300, 2)
    assert jnp.allclose(probs2, _reference_forward(x2, params, phase="eval"),
                        atol=1e-5, rtol=1e-5)

    # ---- bf16 matmul operands (halves the dominant x HBM traffic on v6e/v7x) ----
    x_bf16 = x.astype(jnp.bfloat16)
    params_bf16 = dict(params)
    for name in ("w1", "w2", "w3"):
        params_bf16[name] = params[name].astype(jnp.bfloat16)
    logits_bf16 = jax.block_until_ready(
        propensity_net_forward(x_bf16, params_bf16, phase="train"))
    assert jnp.allclose(logits_bf16, ref_logits, atol=0.1, rtol=0.1)

    print("KERNEL_OK")
</pallas_src>

<mosaic_0001>
module attributes {stable_mosaic.version = 11 : i64} {
  func.func @_mlp_kernel(%arg0: i32, %arg1: memref<16x25xf32, #tpu.memory_space<vmem>>, %arg2: memref<25x25xf32, #tpu.memory_space<vmem>>, %arg3: memref<1x25xf32, #tpu.memory_space<vmem>>, %arg4: memref<25x25xf32, #tpu.memory_space<vmem>>, %arg5: memref<1x25xf32, #tpu.memory_space<vmem>>, %arg6: memref<25x2xf32, #tpu.memory_space<vmem>>, %arg7: memref<1x2xf32, #tpu.memory_space<vmem>>, %arg8: memref<2x2xf32, #tpu.memory_space<vmem>>, %arg9: memref<16x2xf32, #tpu.memory_space<vmem>>) attributes {dimension_semantics = [#tpu.dimension_semantics<parallel>], iteration_bounds = array<i64: 1>, scalar_prefetch = 0 : i64, scratch_operands = 0 : i64, tpu.core_type = #tpu.core_type<tc>, window_params = [{transform_indices = @transform_0, window_bounds = array<i64: 16, 25>}, {pipeline_mode = #tpu.pipeline_mode<synchronous>, transform_indices = @transform_1, window_bounds = array<i64: 25, 25>}, {pipeline_mode = #tpu.pipeline_mode<synchronous>, transform_indices = @transform_2, window_bounds = array<i64: 1, 25>}, {pipeline_mode = #tpu.pipeline_mode<synchronous>, transform_indices = @transform_3, window_bounds = array<i64: 25, 25>}, {pipeline_mode = #tpu.pipeline_mode<synchronous>, transform_indices = @transform_4, window_bounds = array<i64: 1, 25>}, {pipeline_mode = #tpu.pipeline_mode<synchronous>, transform_indices = @transform_5, window_bounds = array<i64: 25, 2>}, {pipeline_mode = #tpu.pipeline_mode<synchronous>, transform_indices = @transform_6, window_bounds = array<i64: 1, 2>}, {pipeline_mode = #tpu.pipeline_mode<synchronous>, transform_indices = @transform_7, window_bounds = array<i64: 2, 2>}, {transform_indices = @transform_8, window_bounds = array<i64: 16, 2>}]} {
    %c0 = arith.constant 0 : index
    %c0_0 = arith.constant 0 : index
    %0 = vector.load %arg1[%c0, %c0_0] : memref<16x25xf32, #tpu.memory_space<vmem>>, vector<16x25xf32>
    %c0_1 = arith.constant 0 : index
    %c0_2 = arith.constant 0 : index
    %1 = vector.load %arg2[%c0_1, %c0_2] : memref<25x25xf32, #tpu.memory_space<vmem>>, vector<25x25xf32>
    %cst = arith.constant dense<0.000000e+00> : vector<16x25xf32>
    %2 = tpu.matmul %0, %1, %cst {dimension_numbers = #tpu.dot_dimension_numbers<[1], [0], [0], [1], [0, 0, 1, 1], [], []>} : vector<16x25xf32>, vector<25x25xf32>, vector<16x25xf32> -> vector<16x25xf32>
    %c0_3 = arith.constant 0 : index
    %c0_4 = arith.constant 0 : index
    %3 = vector.load %arg3[%c0_3, %c0_4] : memref<1x25xf32, #tpu.memory_space<vmem>>, vector<1x25xf32>
    %4 = vector.broadcast %3 : vector<1x25xf32> to vector<16x25xf32>
    %5 = arith.addf %2, %4 : vector<16x25xf32>
    %cst_5 = arith.constant 0.000000e+00 : f32
    %6 = vector.broadcast %cst_5 : f32 to vector<16x25xf32>
    %7 = arith.maximumf %5, %6 : vector<16x25xf32>
    %c0_6 = arith.constant 0 : index
    %c0_7 = arith.constant 0 : index
    %8 = vector.load %arg4[%c0_6, %c0_7] : memref<25x25xf32, #tpu.memory_space<vmem>>, vector<25x25xf32>
    %cst_8 = arith.constant dense<0.000000e+00> : vector<16x25xf32>
    %9 = tpu.matmul %7, %8, %cst_8 {dimension_numbers = #tpu.dot_dimension_numbers<[1], [0], [0], [1], [0, 0, 1, 1], [], []>} : vector<16x25xf32>, vector<25x25xf32>, vector<16x25xf32> -> vector<16x25xf32>
    %c0_9 = arith.constant 0 : index
    %c0_10 = arith.constant 0 : index
    %10 = vector.load %arg5[%c0_9, %c0_10] : memref<1x25xf32, #tpu.memory_space<vmem>>, vector<1x25xf32>
    %11 = vector.broadcast %10 : vector<1x25xf32> to vector<16x25xf32>
    %12 = arith.addf %9, %11 : vector<16x25xf32>
    %cst_11 = arith.constant 0.000000e+00 : f32
    %13 = vector.broadcast %cst_11 : f32 to vector<16x25xf32>
    %14 = arith.maximumf %12, %13 : vector<16x25xf32>
    %c0_12 = arith.constant 0 : index
    %c0_13 = arith.constant 0 : index
    %15 = vector.load %arg6[%c0_12, %c0_13] : memref<25x2xf32, #tpu.memory_space<vmem>>, vector<25x2xf32>
    %cst_14 = arith.constant dense<0.000000e+00> : vector<16x2xf32>
    %16 = tpu.matmul %14, %15, %cst_14 {dimension_numbers = #tpu.dot_dimension_numbers<[1], [0], [0], [1], [0, 0, 1, 1], [], []>} : vector<16x25xf32>, vector<25x2xf32>, vector<16x2xf32> -> vector<16x2xf32>
    %c0_15 = arith.constant 0 : index
    %c0_16 = arith.constant 0 : index
    %17 = vector.load %arg7[%c0_15, %c0_16] : memref<1x2xf32, #tpu.memory_space<vmem>>, vector<1x2xf32>
    %18 = vector.broadcast %17 : vector<1x2xf32> to vector<16x2xf32>
    %19 = arith.addf %16, %18 : vector<16x2xf32>
    %c0_17 = arith.constant 0 : index
    %c0_18 = arith.constant 0 : index
    %20 = vector.load %arg9[%c0_17, %c0_18] : memref<16x2xf32, #tpu.memory_space<vmem>>, vector<16x2xf32>
    tpu.vector_store %arg9[%c0_17, %c0_18], %19 {strides = array<i32>} : memref<16x2xf32, #tpu.memory_space<vmem>>, vector<16x2xf32>,
    return
  }
  func.func @transform_0(%arg0: i32) -> (i32, i32) {
    %c0_i32 = arith.constant 0 : i32
    %c0_i32_0 = arith.constant 0 : i32
    return %arg0, %c0_i32 : i32, i32
  }
  func.func @transform_1(%arg0: i32) -> (i32, i32) {
    %c0_i32 = arith.constant 0 : i32
    %c0_i32_0 = arith.constant 0 : i32
    %c0_i32_1 = arith.constant 0 : i32
    return %c0_i32, %c0_i32_0 : i32, i32
  }
  func.func @transform_2(%arg0: i32) -> (i32, i32) {
    %c0_i32 = arith.constant 0 : i32
    %c0_i32_0 = arith.constant 0 : i32
    %c0_i32_1 = arith.constant 0 : i32
    return %c0_i32, %c0_i32_0 : i32, i32
  }
  func.func @transform_3(%arg0: i32) -> (i32, i32) {
    %c0_i32 = arith.constant 0 : i32
    %c0_i32_0 = arith.constant 0 : i32
    %c0_i32_1 = arith.constant 0 : i32
    return %c0_i32, %c0_i32_0 : i32, i32
  }
  func.func @transform_4(%arg0: i32) -> (i32, i32) {
    %c0_i32 = arith.constant 0 : i32
    %c0_i32_0 = arith.constant 0 : i32
    %c0_i32_1 = arith.constant 0 : i32
    return %c0_i32, %c0_i32_0 : i32, i32
  }
  func.func @transform_5(%arg0: i32) -> (i32, i32) {
    %c0_i32 = arith.constant 0 : i32
    %c0_i32_0 = arith.constant 0 : i32
    %c0_i32_1 = arith.constant 0 : i32
    return %c0_i32, %c0_i32_0 : i32, i32
  }
  func.func @transform_6(%arg0: i32) -> (i32, i32) {
    %c0_i32 = arith.constant 0 : i32
    %c0_i32_0 = arith.constant 0 : i32
    %c0_i32_1 = arith.constant 0 : i32
    return %c0_i32, %c0_i32_0 : i32, i32
  }
  func.func @transform_7(%arg0: i32) -> (i32, i32) {
    %c0_i32 = arith.constant 0 : i32
    %c0_i32_0 = arith.constant 0 : i32
    %c0_i32_1 = arith.constant 0 : i32
    return %c0_i32, %c0_i32_0 : i32, i32
  }
  func.func @transform_8(%arg0: i32) -> (i32, i32) {
    %c0_i32 = arith.constant 0 : i32
    %c0_i32_0 = arith.constant 0 : i32
    return %arg0, %c0_i32 : i32, i32
  }
}

</mosaic_0001>

<llo_original>
// kernel: tpu_custom_call.1
$region0: #{tpu_custom_call.1}
  #allocation0 [shape = 'u32[]', space=smem, size = 0x4, offset = 0x4, fixed_abs, tag = 'smem constant byte address 0x4 - core index']
  #allocation1 [shape = 'u32[144,128]{1,0:T(1,128)}', space=vmem, size = 0x12000, scoped, tag = 'internal scratch']
  %s0 = inlined_call_operand.hbm [shape: f32[16,25], index: 0, kind: input, shape index: {}]
  %s1 = inlined_call_operand.vmem [shape: f32[25,25], index: 1, kind: input, shape index: {}]
  %s2 = inlined_call_operand.vmem [shape: f32[1,25], index: 2, kind: input, shape index: {}]
  %s3 = inlined_call_operand.hbm [shape: f32[25,25], index: 3, kind: input, shape index: {}]
  %s4 = inlined_call_operand.vmem [shape: f32[1,25], index: 4, kind: input, shape index: {}]
  %s5 = inlined_call_operand.vmem [shape: f32[25,2], index: 5, kind: input, shape index: {}]
  %s6 = inlined_call_operand.vmem [shape: f32[1,2], index: 6, kind: input, shape index: {}]
  %s7 = inlined_call_operand.vmem [shape: f32[2,2], index: 7, kind: input, shape index: {}]
  %s8 = inlined_call_operand.vmem [shape: f32[16,2], index: 8, kind: output, shape index: {}]
  %s9 = sld [smem:[#allocation0]]
  $region50: #{tpu_custom_call.1} parent=0
    _
  %s11 = ssub.s32 1, %s9
  %s12 = scalar_select 0, %s11, %s9
  $region1: #{tpu_custom_call.1} parent=0
    #allocation2 [shape = 'u8[8192]{0}', space=vmem, size = 0x2000, scoped, tag = 'input window, operand 0, single buffered']
    #allocation3 [shape = 's32[1]{0}', space=sflag, size = 0x4, scoped, tag = 'scoped memory for tpu_custom_call.1']
    #allocation4 [shape = 'u8[16384]{0}', space=vmem, size = 0x4000, scoped, tag = 'input window, operand 3, single buffered']
    #allocation5 [shape = 's32[1]{0}', space=sflag, size = 0x4, scoped, tag = 'scoped memory for tpu_custom_call.1']
    %13 = vsyncpa [#allocation3], 0
    %14 = vsyncpa [#allocation5], 0
    // Predicated region
    $region2: #{tpu_custom_call.1} parent=1 // pred_check
      _
    $region3: #{tpu_custom_call.1} parent=1 // pred_check_branch
      %16 = sbr.rel (0) target = $region5
    $region4: #{tpu_custom_call.1} parent=1 // pred_region
      %s18 = ssub.s32 256, 256
      %19 = vsyncadd [#allocation3], %s18
      %s20 = sshll.u32 [#allocation2], 4
      %s21 = int_to_ptr.vmem [resolvable:$true] %s20
      %26 = dma.hbm_to_vmem [thread:$0]  %s0, 256, %s21, [#allocation3], 128, 128, 8
    $region5: #{tpu_custom_call.1} parent=1 // pred_fallthru
      _
    // Predicated region
    $region6: #{tpu_custom_call.1} parent=1 // pred_check
      _
    $region7: #{tpu_custom_call.1} parent=1 // pred_check_branch
      %28 = sbr.rel (0) target = $region9
    $region8: #{tpu_custom_call.1} parent=1 // pred_region
      _
    $region9: #{tpu_custom_call.1} parent=1 // pred_fallthru
      _
    // Predicated region
    $region10: #{tpu_custom_call.1} parent=1 // pred_check
      _
    $region11: #{tpu_custom_call.1} parent=1 // pred_check_branch
      %30 = sbr.rel (0) target = $region13
    $region12: #{tpu_custom_call.1} parent=1 // pred_region
      _
    $region13: #{tpu_custom_call.1} parent=1 // pred_fallthru
      _
    // Predicated region
    $region14: #{tpu_custom_call.1} parent=1 // pred_check
      _
    $region15: #{tpu_custom_call.1} parent=1 // pred_check_branch
      %32 = sbr.rel (0) target = $region17
    $region16: #{tpu_custom_call.1} parent=1 // pred_region
      %s34 = ssub.s32 512, 512
      %35 = vsyncadd [#allocation5], %s34
      %s36 = sshll.u32 [#allocation4], 4
      %s37 = int_to_ptr.vmem [resolvable:$true] %s36
      %42 = dma.hbm_to_vmem [thread:$0]  %s3, 512, %s37, [#allocation5], 128, 128, 8
    $region17: #{tpu_custom_call.1} parent=1 // pred_fallthru
      _
    // Predicated region
    $region18: #{tpu_custom_call.1} parent=1 // pred_check
      _
    $region19: #{tpu_custom_call.1} parent=1 // pred_check_branch
      %44 = sbr.rel (0) target = $region21
    $region20: #{tpu_custom_call.1} parent=1 // pred_region
      _
    $region21: #{tpu_custom_call.1} parent=1 // pred_fallthru
      _
    // Predicated region
    $region22: #{tpu_custom_call.1} parent=1 // pred_check
      _
    $region23: #{tpu_custom_call.1} parent=1 // pred_check_branch
      %46 = sbr.rel (0) target = $region25
    $region24: #{tpu_custom_call.1} parent=1 // pred_region
      _
    $region25: #{tpu_custom_call.1} parent=1 // pred_fallthru
      _
    // Predicated region
    $region26: #{tpu_custom_call.1} parent=1 // pred_check
      _
    $region27: #{tpu_custom_call.1} parent=1 // pred_check_branch
      %48 = sbr.rel (0) target = $region29
    $region28: #{tpu_custom_call.1} parent=1 // pred_region
      _
    $region29: #{tpu_custom_call.1} parent=1 // pred_fallthru
      _
    // Predicated region
    $region30: #{tpu_custom_call.1} parent=1 // pred_check
      _
    $region31: #{tpu_custom_call.1} parent=1 // pred_check_branch
      %50 = sbr.rel (0) target = $region33
    $region32: #{tpu_custom_call.1} parent=1 // pred_region
      _
    $region33: #{tpu_custom_call.1} parent=1 // pred_fallthru
      _
    // Predicated region
    $region34: #{tpu_custom_call.1} parent=1 // pred_check
      _
    $region35: #{tpu_custom_call.1} parent=1 // pred_check_branch
      %52 = sbr.rel (0) target = $region37
    $region36: #{tpu_custom_call.1} parent=1 // pred_region
      %53 = dma.done [#allocation3], 256
    $region37: #{tpu_custom_call.1} parent=1 // pred_fallthru
      _
    // Predicated region
    $region38: #{tpu_custom_call.1} parent=1 // pred_check
      _
    $region39: #{tpu_custom_call.1} parent=1 // pred_check_branch
      %55 = sbr.rel (0) target = $region41
    $region40: #{tpu_custom_call.1} parent=1 // pred_region
      %56 = dma.done [#allocation5], 512
    $region41: #{tpu_custom_call.1} parent=1 // pred_fallthru
      _
    %v57 = vld [vmem:[#allocation2] sm:$0xff]
    %v58 = vld [vmem:[#allocation2 + $0x8] sm:$0xff]
    %v59 = vld [vmem:[%s1] sm:$0xff]
    %v60 = vld [vmem:[%s1 + $0x8] sm:$0xff]
    %v61 = vld [vmem:[%s1 + $0x10] sm:$0xff]
    %v62 = vld [vmem:[%s1 + $0x18] sm:$0x1]
    %v63 = vld [vmem:[%s2] sm:$0x1]
    %v65 = vlaneseq
    %v66 = vshrl.u32 %v65, 7
    %v67 = vsub.s32 0, %v66
    %v68 = vrot.slane %v63, %v67
    %vm70 = vcmask 203776
    %v72 = vsel %vm70, %v57, 0
    %v75 = vsel %vm70, %v58, 0
    %vm77 = vcmask 1040384
    %v79 = vsel %vm77, %v62, 0
    %81 = vmatprep.subr.mxu0 0.0
    %82 = vmatpush1.msra.mxu0 %v59
    %83 = vmatprep.subr.mxu0 0.0
    %84 = vmatpush1.msra.mxu0 %v60
    %85 = vmatprep.subr.mxu0 0.0
    %86 = vmatpush1.msra.mxu0 %v61
    %87 = vmatprep.subr.mxu0 0.0
    %88 = vmatpush1.msra.mxu0 %v79
    %89 = vmatprep.subr.mxu0 0.0
    %90 = vmatpush1.msra.mxu0 0.0
    %91 = vmatprep.subr.mxu0 0.0
    %92 = vmatpush1.msra.mxu0 0.0
    %93 = vmatprep.subr.mxu0 0.0
    %94 = vmatpush1.msra.mxu0 0.0
    %95 = vmatprep.subr.mxu0 0.0
    %96 = vmatpush1.msra.mxu0 0.0
    %97 = vmatprep.subr.mxu0 0.0
    %98 = vmatpush1.msra.mxu0 0.0
    %99 = vmatprep.subr.mxu0 0.0
    %100 = vmatpush1.msra.mxu0 0.0
    %101 = vmatprep.subr.mxu0 0.0
    %102 = vmatpush1.msra.mxu0 0.0
    %103 = vmatprep.subr.mxu0 0.0
    %104 = vmatpush1.msra.mxu0 0.0
    %105 = vmatprep.subr.mxu0 0.0
    %106 = vmatpush1.msra.mxu0 0.0
    %107 = vmatprep.subr.mxu0 0.0
    %108 = vmatpush1.msra.mxu0 0.0
    %109 = vmatprep.subr.mxu0 0.0
    %110 = vmatpush1.msra.mxu0 0.0
    %111 = vmatprep.subr.mxu0 0.0
    %112 = vmatpush1.msra.mxu0 0.0
    %113 = vmatprep.subr.mxu0 0.0
    %114 = vmatpush1.msra.mxu0 0.0
    %115 = vmatprep.subr.mxu0 0.0
    %116 = vmatpush1.msra.mxu0 0.0
    %117 = vmatprep.subr.mxu0 0.0
    %118 = vmatpush1.msra.mxu0 0.0
    %119 = vmatprep.subr.mxu0 0.0
    %120 = vmatpush1.msra.mxu0 0.0
    %121 = vmatprep.subr.mxu0 0.0
    %122 = vmatpush1.msra.mxu0 0.0
    %123 = vmatprep.subr.mxu0 0.0
    %124 = vmatpush1.msra.mxu0 0.0
    %125 = vmatprep.subr.mxu0 0.0
    %126 = vmatpush1.msra.mxu0 0.0
    %127 = vmatprep.subr.mxu0 0.0
    %128 = vmatpush1.msra.mxu0 0.0
    %129 = vmatprep.subr.mxu0 0.0
    %130 = vmatpush1.msra.mxu0 0.0
    %131 = vmatprep.subr.mxu0 0.0
    %132 = vmatpush1.msra.mxu0 0.0
    %133 = vmatprep.subr.mxu0 0.0
    %134 = vmatpush1.msra.mxu0 0.0
    %135 = vmatprep.subr.mxu0 0.0
    %136 = vmatpush1.msra.mxu0 0.0
    %137 = vmatprep.subr.mxu0 0.0
    %138 = vmatpush1.msra.mxu0 0.0
    %139 = vmatprep.subr.mxu0 0.0
    %140 = vmatpush1.msra.mxu0 0.0
    %141 = vmatprep.subr.mxu0 0.0
    %142 = vmatpush1.msra.mxu0 0.0
    %143 = vmatprep.subr.mxu0 0.0
    %144 = vmatpush1.msra.mxu0 0.0
    %145 = vmatprep.mubr.f32.mxu0 0.0
    %146 = vmatmul.mubr.f32.gmra.mrb[0].mxu0 %v72
    %v147 = vpop.f32.mrb[0].mxu0
    %v148 = vadd.f32 %v68, %v147
    %v149 = vpop.f32.mrb[0].mxu0
    %150 = vmatprep.mubr.f32.mxu0 0.0
    %151 = vmatmul.mubr.f32.gmra.mrb[0].mxu0 %v75
    %v152 = vpop.f32.mrb[0].mxu0
    %v153 = vadd.f32 %v68, %v152
    %v154 = vpop.f32.mrb[0].mxu0
    %155 = vdwg.mxu0
    %v156 = vmax.f32 %v148, 0.0
    %v157 = vmax.f32 %v153, 0.0
    %v158 = vld [vmem:[#allocation4] sm:$0xff]
    %v159 = vld [vmem:[#allocation4 + $0x8] sm:$0xff]
    %v160 = vld [vmem:[#allocation4 + $0x10] sm:$0xff]
    %v161 = vld [vmem:[#allocation4 + $0x18] sm:$0x1]
    %v162 = vld [vmem:[%s4] sm:$0x1]
    %v164 = vlaneseq
    %v165 = vshrl.u32 %v164, 7
    %v166 = vsub.s32 0, %v165
    %v167 = vrot.slane %v162, %v166
    %v170 = vsel %vm70, %v156, 0
    %v173 = vsel %vm70, %v157, 0
    %v176 = vsel %vm77, %v161, 0
    %178 = vmatprep.subr.mxu0 0.0
    %179 = vmatpush1.msra.mxu0 %v158
    %180 = vmatprep.subr.mxu0 0.0
    %181 = vmatpush1.msra.mxu0 %v159
    %182 = vmatprep.subr.mxu0 0.0
    %183 = vmatpush1.msra.mxu0 %v160
    %184 = vmatprep.subr.mxu0 0.0
    %185 = vmatpush1.msra.mxu0 %v176
    %186 = vmatprep.subr.mxu0 0.0
    %187 = vmatpush1.msra.mxu0 0.0
    %188 = vmatprep.subr.mxu0 0.0
    %189 = vmatpush1.msra.mxu0 0.0
    %190 = vmatprep.subr.mxu0 0.0
    %191 = vmatpush1.msra.mxu0 0.0
    %192 = vmatprep.subr.mxu0 0.0
    %193 = vmatpush1.msra.mxu0 0.0
    %194 = vmatprep.subr.mxu0 0.0
    %195 = vmatpush1.msra.mxu0 0.0
    %196 = vmatprep.subr.mxu0 0.0
    %197 = vmatpush1.msra.mxu0 0.0
    %198 = vmatprep.subr.mxu0 0.0
    %199 = vmatpush1.msra.mxu0 0.0
    %200 = vmatprep.subr.mxu0 0.0
    %201 = vmatpush1.msra.mxu0 0.0
    %202 = vmatprep.subr.mxu0 0.0
    %203 = vmatpush1.msra.mxu0 0.0
    %204 = vmatprep.subr.mxu0 0.0
    %205 = vmatpush1.msra.mxu0 0.0
    %206 = vmatprep.subr.mxu0 0.0
    %207 = vmatpush1.msra.mxu0 0.0
    %208 = vmatprep.subr.mxu0 0.0
    %209 = vmatpush1.msra.mxu0 0.0
    %210 = vmatprep.subr.mxu0 0.0
    %211 = vmatpush1.msra.mxu0 0.0
    %212 = vmatprep.subr.mxu0 0.0
    %213 = vmatpush1.msra.mxu0 0.0
    %214 = vmatprep.subr.mxu0 0.0
    %215 = vmatpush1.msra.mxu0 0.0
    %216 = vmatprep.subr.mxu0 0.0
    %217 = vmatpush1.msra.mxu0 0.0
    %218 = vmatprep.subr.mxu0 0.0
    %219 = vmatpush1.msra.mxu0 0.0
    %220 = vmatprep.subr.mxu0 0.0
    %221 = vmatpush1.msra.mxu0 0.0
    %222 = vmatprep.subr.mxu0 0.0
    %223 = vmatpush1.msra.mxu0 0.0
    %224 = vmatprep.subr.mxu0 0.0
    %225 = vmatpush1.msra.mxu0 0.0
    %226 = vmatprep.subr.mxu0 0.0
    %227 = vmatpush1.msra.mxu0 0.0
    %228 = vmatprep.subr.mxu0 0.0
    %229 = vmatpush1.msra.mxu0 0.0
    %230 = vmatprep.subr.mxu0 0.0
    %231 = vmatpush1.msra.mxu0 0.0
    %232 = vmatprep.subr.mxu0 0.0
    %233 = vmatpush1.msra.mxu0 0.0
    %234 = vmatprep.subr.mxu0 0.0
    %235 = vmatpush1.msra.mxu0 0.0
    %236 = vmatprep.subr.mxu0 0.0
    %237 = vmatpush1.msra.mxu0 0.0
    %238 = vmatprep.subr.mxu0 0.0
    %239 = vmatpush1.msra.mxu0 0.0
    %240 = vmatprep.subr.mxu0 0.0
    %241 = vmatpush1.msra.mxu0 0.0
    %242 = vmatprep.mubr.f32.mxu0 0.0
    %243 = vmatmul.mubr.f32.gmra.mrb[0].mxu0 %v170
    %v244 = vpop.f32.mrb[0].mxu0
    %v245 = vadd.f32 %v167, %v244
    %v246 = vpop.f32.mrb[0].mxu0
    %247 = vmatprep.mubr.f32.mxu0 0.0
    %248 = vmatmul.mubr.f32.gmra.mrb[0].mxu0 %v173
    %v249 = vpop.f32.mrb[0].mxu0
    %v250 = vadd.f32 %v167, %v249
    %v251 = vpop.f32.mrb[0].mxu0
    %252 = vdwg.mxu0
    %v253 = vmax.f32 %v245, 0.0
    %v254 = vmax.f32 %v250, 0.0
    %v255 = vld [vmem:[%s5] sm:$0xff]
    %v256 = vld [vmem:[%s5 + $0x8] sm:$0xff]
    %v257 = vld [vmem:[%s5 + $0x10] sm:$0xff]
    %v258 = vld [vmem:[%s5 + $0x18] sm:$0x1]
    %v259 = vld [vmem:[%s6] sm:$0x1]
    %v261 = vlaneseq
    %v262 = vshrl.u32 %v261, 7
    %v263 = vsub.s32 0, %v262
    %v264 = vrot.slane %v259, %v263
    %v267 = vsel %vm70, %v253, 0
    %v270 = vsel %vm70, %v254, 0
    %v273 = vsel %vm77, %v258, 0
    %275 = vmatprep.subr.mxu0 0.0
    %276 = vmatpush1.msra.mxu0 %v255
    %277 = vmatprep.subr.mxu0 0.0
    %278 = vmatpush1.msra.mxu0 %v256
    %279 = vmatprep.subr.mxu0 0.0
    %280 = vmatpush1.msra.mxu0 %v257
    %281 = vmatprep.subr.mxu0 0.0
    %282 = vmatpush1.msra.mxu0 %v273
    %283 = vmatprep.subr.mxu0 0.0
    %284 = vmatpush1.msra.mxu0 0.0
    %285 = vmatprep.subr.mxu0 0.0
    %286 = vmatpush1.msra.mxu0 0.0
    %287 = vmatprep.subr.mxu0 0.0
    %288 = vmatpush1.msra.mxu0 0.0
    %289 = vmatprep.subr.mxu0 0.0
    %290 = vmatpush1.msra.mxu0 0.0
    %291 = vmatprep.subr.mxu0 0.0
    %292 = vmatpush1.msra.mxu0 0.0
    %293 = vmatprep.subr.mxu0 0.0
    %294 = vmatpush1.msra.mxu0 0.0
    %295 = vmatprep.subr.mxu0 0.0
    %296 = vmatpush1.msra.mxu0 0.0
    %297 = vmatprep.subr.mxu0 0.0
    %298 = vmatpush1.msra.mxu0 0.0
    %299 = vmatprep.subr.mxu0 0.0
    %300 = vmatpush1.msra.mxu0 0.0
    %301 = vmatprep.subr.mxu0 0.0
    %302 = vmatpush1.msra.mxu0 0.0
    %303 = vmatprep.subr.mxu0 0.0
    %304 = vmatpush1.msra.mxu0 0.0
    %305 = vmatprep.subr.mxu0 0.0
    %306 = vmatpush1.msra.mxu0 0.0
    %307 = vmatprep.subr.mxu0 0.0
    %308 = vmatpush1.msra.mxu0 0.0
    %309 = vmatprep.subr.mxu0 0.0
    %310 = vmatpush1.msra.mxu0 0.0
    %311 = vmatprep.subr.mxu0 0.0
    %312 = vmatpush1.msra.mxu0 0.0
    %313 = vmatprep.subr.mxu0 0.0
    %314 = vmatpush1.msra.mxu0 0.0
    %315 = vmatprep.subr.mxu0 0.0
    %316 = vmatpush1.msra.mxu0 0.0
    %317 = vmatprep.subr.mxu0 0.0
    %318 = vmatpush1.msra.mxu0 0.0
    %319 = vmatprep.subr.mxu0 0.0
    %320 = vmatpush1.msra.mxu0 0.0
    %321 = vmatprep.subr.mxu0 0.0
    %322 = vmatpush1.msra.mxu0 0.0
    %323 = vmatprep.subr.mxu0 0.0
    %324 = vmatpush1.msra.mxu0 0.0
    %325 = vmatprep.subr.mxu0 0.0
    %326 = vmatpush1.msra.mxu0 0.0
    %327 = vmatprep.subr.mxu0 0.0
    %328 = vmatpush1.msra.mxu0 0.0
    %329 = vmatprep.subr.mxu0 0.0
    %330 = vmatpush1.msra.mxu0 0.0
    %331 = vmatprep.subr.mxu0 0.0
    %332 = vmatpush1.msra.mxu0 0.0
    %333 = vmatprep.subr.mxu0 0.0
    %334 = vmatpush1.msra.mxu0 0.0
    %335 = vmatprep.subr.mxu0 0.0
    %336 = vmatpush1.msra.mxu0 0.0
    %337 = vmatprep.subr.mxu0 0.0
    %338 = vmatpush1.msra.mxu0 0.0
    %339 = vmatprep.mubr.f32.mxu0 0.0
    %340 = vmatmul.mubr.f32.gmra.mrb[0].mxu0 %v267
    %v341 = vpop.f32.mrb[0].mxu0
    %v342 = vadd.f32 %v264, %v341
    %v343 = vpop.f32.mrb[0].mxu0
    %344 = vmatprep.mubr.f32.mxu0 0.0
    %345 = vmatmul.mubr.f32.gmra.mrb[0].mxu0 %v270
    %v346 = vpop.f32.mrb[0].mxu0
    %v347 = vadd.f32 %v264, %v346
    %v348 = vpop.f32.mrb[0].mxu0
    %349 = vdwg.mxu0
    %vm350 = vcmask 15360
    %351 = vst.msk [vmem:[%s8] sm:$0xff] %vm350, %v342
    %352 = vst.msk [vmem:[%s8 + $0x8] sm:$0xff] %vm350, %v347
    // Predicated region
    $region42: #{tpu_custom_call.1} parent=1 // pred_check
      _
    $region43: #{tpu_custom_call.1} parent=1 // pred_check_branch
      %354 = sbr.rel (0) target = $region45
    $region44: #{tpu_custom_call.1} parent=1 // pred_region
      _
    $region45: #{tpu_custom_call.1} parent=1 // pred_fallthru
      _
    // Predicated region
    $region46: #{tpu_custom_call.1} parent=1 // pred_check
      _
    $region47: #{tpu_custom_call.1} parent=1 // pred_check_branch
      %356 = sbr.rel (0) target = $region49
    $region48: #{tpu_custom_call.1} parent=1 // pred_region
      _
    $region49: #{tpu_custom_call.1} parent=1 // pred_fallthru
      _
    %357 = vsyncpa [#allocation3], 1
    %358 = vsyncpa [#allocation5], 1

</llo_original>
